<compile_context>
chip_gen: v6e
topology: v6e:2x2x1
jax: 0.10.0
libtpu: 0.0.40
codegen_flags: <defaults>
</compile_context>

<pallas_src>
import functools

import jax
import jax.numpy as jnp
from jax.experimental import pallas as pl
from jax.experimental.pallas import tpu as pltpu


def _rmsnorm_kernel(x_ref, w_ref, o_ref, *, eps: float):
    # x_ref: (tile_rows, dim), w_ref: (1, dim) [out dtype], o_ref: (tile_rows, dim)
    x32 = x_ref[...].astype(jnp.float32)                     # x.float()
    ms = jnp.mean(x32 * x32, axis=-1, keepdims=True)         # x.pow(2).mean(-1)
    inv = jax.lax.rsqrt(ms + eps)                            # torch.rsqrt(... + eps)
    if x_ref.dtype == jnp.float32:
        normed = x32 * inv                                   # exact f32 path
    else:
        # One pass over the narrow tile instead of reusing the f32 copy
        # (~1 ulp vs. the f32-multiply-then-downcast reference).
        normed = x_ref[...] * inv.astype(x_ref.dtype)        # .type_as(x)
    o_ref[...] = normed.astype(o_ref.dtype) * w_ref[...]     # * weight


def _sublane_pack(dtype) -> int:
    return {1: 32, 2: 16, 4: 8}.get(jnp.dtype(dtype).itemsize, 8)


def _round_up(x: int, m: int) -> int:
    return ((x + m - 1) // m) * m


def _vmem_capacity_bytes() -> int:
    try:
        cap = getattr(pltpu.get_tpu_info(), "vmem_capacity_bytes", None)
        if cap:
            return int(cap)
    except Exception:
        pass
    return 64 * 1024 * 1024  # conservative (v7x-sized) fallback


def _choose_tile_rows(rows: int, dim: int, in_dtype, out_dtype, vmem_cap: int) -> int:
    sub = _sublane_pack(in_dtype)
    in_row = dim * jnp.dtype(in_dtype).itemsize
    out_row = dim * jnp.dtype(out_dtype).itemsize
    f32_row = dim * 4

    # Live VMEM per row of tile: 2x double-buffered input + 2x double-buffered
    # output + ~2 f32 tile-sized intermediates (upcast x, x*x / normed).
    per_row = 2 * in_row + 2 * out_row + 2 * f32_row
    budget = int(vmem_cap * 0.45)                       # leave compiler headroom
    max_rows_by_vmem = max(sub, budget // per_row)

    # Target ~6 MiB input tiles so the ~0.35 us fixed per-step cost is <5%
    # even at v7x's 3.2 TB/s HBM.
    target_rows = max(sub, (6 * 1024 * 1024) // max(in_row, 1))
    tr = min(target_rows, max_rows_by_vmem)

    # Keep >= 8 grid steps (>= 4 per v7x TensorCore) when rows allow, but never
    # shrink a tile below ~1 MiB of input for it.
    min_rows_for_overlap = max(sub, (1 * 1024 * 1024) // max(in_row, 1))
    if rows // 8 >= min_rows_for_overlap:
        tr = min(tr, rows // 8)

    tr = min(tr, _round_up(rows, sub))                  # no point exceeding the array
    tr = max(sub, (tr // sub) * sub)                    # sublane-pack multiple
    return tr


def rmsnorm(x: jax.Array, weight: jax.Array, eps: float = 1e-6) -> jax.Array:
    """RMSNorm over the last axis of x. x: (..., dim); weight: (dim,)."""
    orig_shape = x.shape
    dim = orig_shape[-1]
    rows = 1
    for s in orig_shape[:-1]:
        rows *= s

    # PyTorch promotion: `_norm(x.float()).type_as(x) * weight`
    out_dtype = jnp.promote_types(x.dtype, weight.dtype)

    x2d = x.reshape(rows, dim)
    w2d = weight.reshape(1, dim).astype(out_dtype)

    vmem_cap = _vmem_capacity_bytes()
    tile_rows = _choose_tile_rows(rows, dim, x.dtype, out_dtype, vmem_cap)
    grid = (pl.cdiv(rows, tile_rows),)   # ragged last block handled by masking

    out2d = pl.pallas_call(
        functools.partial(_rmsnorm_kernel, eps=eps),
        out_shape=jax.ShapeDtypeStruct((rows, dim), out_dtype),
        grid_spec=pltpu.PrefetchScalarGridSpec(
            num_scalar_prefetch=0,
            grid=grid,
            in_specs=[
                pl.BlockSpec((tile_rows, dim), lambda i: (i, 0)),
                pl.BlockSpec((1, dim), lambda i: (0, 0)),
            ],
            out_specs=pl.BlockSpec((tile_rows, dim), lambda i: (i, 0)),
        ),
        compiler_params=pltpu.CompilerParams(
            dimension_semantics=("parallel",),
            vmem_limit_bytes=int(min(vmem_cap * 3 // 4, 96 * 1024 * 1024)),
        ),
    )(x2d, w2d)

    return out2d.reshape(orig_shape[:-1] + (dim,))


def rmsnorm_ref(x, weight, eps=1e-6):
    xf = x.astype(jnp.float32)
    inv = jax.lax.rsqrt(jnp.mean(xf * xf, axis=-1, keepdims=True) + eps)
    normed = (xf * inv).astype(x.dtype)          # .type_as(x)
    return normed * weight                        # jnp promotion == torch promotion


if __name__ == "__main__":
    key = jax.random.PRNGKey(0)
    k0, k1, k2 = jax.random.split(key, 3)

    dim = 512  # ModelArgs.dim
    weight = jnp.ones((dim,), dtype=jnp.float32)  # nn.Parameter(torch.ones(dim))

    # Main case: (batch=2, seq=8, dim=512), f32 — mirrors the module's usage.
    x = jax.random.normal(k0, (2, 8, dim), dtype=jnp.float32)
    out = jax.block_until_ready(rmsnorm(x, weight, eps=1e-6))
    ref = rmsnorm_ref(x, weight, eps=1e-6)
    assert out.shape == x.shape and out.dtype == ref.dtype
    assert jnp.allclose(out, ref, atol=1e-5, rtol=1e-5)

    # Ragged row count (exercises the masked last block — no pad/slice path).
    x_rag = jax.random.normal(k1, (3, 7, dim), dtype=jnp.float32)
    out_rag = jax.block_until_ready(rmsnorm(x_rag, weight, eps=1e-6))
    ref_rag = rmsnorm_ref(x_rag, weight, eps=1e-6)
    assert jnp.allclose(out_rag, ref_rag, atol=1e-5, rtol=1e-5)

    # bf16 activations with f32 weight (exercises narrow-scale path + promotion).
    x_bf = jax.random.normal(k2, (2, 8, dim), dtype=jnp.bfloat16)
    out_bf = jax.block_until_ready(rmsnorm(x_bf, weight, eps=1e-6))
    ref_bf = rmsnorm_ref(x_bf, weight, eps=1e-6)
    assert out_bf.dtype == ref_bf.dtype
    assert jnp.allclose(out_bf.astype(jnp.float32), ref_bf.astype(jnp.float32),
                        atol=2e-2, rtol=2e-2)

    print("KERNEL_OK")
</pallas_src>

<mosaic_0001>
module attributes {stable_mosaic.version = 11 : i64} {
  func.func @_rmsnorm_kernel(%arg0: i32, %arg1: memref<16x512xf32, #tpu.memory_space<vmem>>, %arg2: memref<1x512xf32, #tpu.memory_space<vmem>>, %arg3: memref<16x512xf32, #tpu.memory_space<vmem>>) attributes {dimension_semantics = [#tpu.dimension_semantics<parallel>], iteration_bounds = array<i64: 1>, scalar_prefetch = 0 : i64, scratch_operands = 0 : i64, tpu.core_type = #tpu.core_type<tc>, window_params = [{transform_indices = @transform_0, window_bounds = array<i64: 16, 512>}, {pipeline_mode = #tpu.pipeline_mode<synchronous>, transform_indices = @transform_1, window_bounds = array<i64: 1, 512>}, {transform_indices = @transform_2, window_bounds = array<i64: 16, 512>}]} {
    %c0 = arith.constant 0 : index
    %c0_0 = arith.constant 0 : index
    %0 = vector.load %arg1[%c0, %c0_0] : memref<16x512xf32, #tpu.memory_space<vmem>>, vector<16x512xf32>
    %1 = arith.mulf %0, %0 : vector<16x512xf32>
    %cst = arith.constant dense<0.000000e+00> : vector<16xf32>
    %2 = vector.multi_reduction <add>, %1, %cst [1] : vector<16x512xf32> to vector<16xf32>
    %3 = vector.shape_cast %2 : vector<16xf32> to vector<16x1xf32>
    %cst_1 = arith.constant 5.120000e+02 : f32
    %4 = vector.broadcast %cst_1 : f32 to vector<16x1xf32>
    %5 = arith.divf %3, %4 : vector<16x1xf32>
    %cst_2 = arith.constant 9.99999997E-7 : f32
    %6 = vector.broadcast %cst_2 : f32 to vector<16x1xf32>
    %7 = arith.addf %5, %6 : vector<16x1xf32>
    %8 = math.rsqrt %7 : vector<16x1xf32>
    %9 = vector.broadcast %8 : vector<16x1xf32> to vector<16x512xf32>
    %10 = arith.mulf %0, %9 : vector<16x512xf32>
    %c0_3 = arith.constant 0 : index
    %c0_4 = arith.constant 0 : index
    %11 = vector.load %arg2[%c0_3, %c0_4] : memref<1x512xf32, #tpu.memory_space<vmem>>, vector<1x512xf32>
    %12 = vector.broadcast %11 : vector<1x512xf32> to vector<16x512xf32>
    %13 = arith.mulf %10, %12 : vector<16x512xf32>
    %c0_5 = arith.constant 0 : index
    %c0_6 = arith.constant 0 : index
    %14 = vector.load %arg3[%c0_5, %c0_6] : memref<16x512xf32, #tpu.memory_space<vmem>>, vector<16x512xf32>
    tpu.vector_store %arg3[%c0_5, %c0_6], %13 {strides = array<i32>} : memref<16x512xf32, #tpu.memory_space<vmem>>, vector<16x512xf32>,
    return
  }
  func.func @transform_0(%arg0: i32) -> (i32, i32) {
    %c0_i32 = arith.constant 0 : i32
    %c0_i32_0 = arith.constant 0 : i32
    return %arg0, %c0_i32 : i32, i32
  }
  func.func @transform_1(%arg0: i32) -> (i32, i32) {
    %c0_i32 = arith.constant 0 : i32
    %c0_i32_0 = arith.constant 0 : i32
    %c0_i32_1 = arith.constant 0 : i32
    return %c0_i32, %c0_i32_0 : i32, i32
  }
  func.func @transform_2(%arg0: i32) -> (i32, i32) {
    %c0_i32 = arith.constant 0 : i32
    %c0_i32_0 = arith.constant 0 : i32
    return %arg0, %c0_i32 : i32, i32
  }
}

</mosaic_0001>

<llo_original>
// kernel: tpu_custom_call.1
$region0: #{tpu_custom_call.1}
  #allocation0 [shape = 'u32[]', space=smem, size = 0x4, offset = 0x4, fixed_abs, tag = 'smem constant byte address 0x4 - core index']
  #allocation1 [shape = 'u32[144,128]{1,0:T(1,128)}', space=vmem, size = 0x12000, scoped, tag = 'internal scratch']
  %s0 = inlined_call_operand.hbm [shape: f32[16,512], index: 0, kind: input, shape index: {}]
  %s1 = inlined_call_operand.hbm [shape: f32[1,512], index: 1, kind: input, shape index: {}]
  %s2 = inlined_call_operand.hbm [shape: f32[16,512], index: 2, kind: output, shape index: {}]
  %s3 = sld [smem:[#allocation0]]
  $region26: #{tpu_custom_call.1} parent=0
    _
  %s5 = ssub.s32 1, %s3
  %s6 = scalar_select 0, %s5, %s3
  $region1: #{tpu_custom_call.1} parent=0
    #allocation2 [shape = 'u8[32768]{0}', space=vmem, size = 0x8000, scoped, tag = 'input window, operand 0, single buffered']
    #allocation3 [shape = 's32[1]{0}', space=sflag, size = 0x4, scoped, tag = 'scoped memory for tpu_custom_call.1']
    #allocation4 [shape = 's32[1]{0}', space=sflag, size = 0x4, scoped, tag = 'scoped memory for tpu_custom_call.1']
    #allocation5 [shape = 'u8[2048]{0}', space=vmem, size = 0x800, scoped, tag = 'input window, operand 1, single buffered']
    #allocation6 [shape = 's32[1]{0}', space=sflag, size = 0x4, scoped, tag = 'scoped memory for tpu_custom_call.1']
    #allocation7 [shape = 'u8[32768]{0}', space=vmem, size = 0x8000, scoped, tag = 'output window, operand 0, single buffered']
    %7 = vsyncpa [#allocation3], 0
    %8 = vsyncpa [#allocation6], 0
    %9 = vsyncpa [#allocation4], 0
    // Predicated region
    $region2: #{tpu_custom_call.1} parent=1 // pred_check
      _
    $region3: #{tpu_custom_call.1} parent=1 // pred_check_branch
      %11 = sbr.rel (0) target = $region5
    $region4: #{tpu_custom_call.1} parent=1 // pred_region
      %s13 = ssub.s32 1024, 1024
      %14 = vsyncadd [#allocation3], %s13
      %s15 = sshll.u32 [#allocation2], 4
      %s16 = int_to_ptr.vmem [resolvable:$true] %s15
      %21 = dma.hbm_to_vmem [thread:$0]  %s0, 1024, %s16, [#allocation3], 512, 512, 32
    $region5: #{tpu_custom_call.1} parent=1 // pred_fallthru
      _
    // Predicated region
    $region6: #{tpu_custom_call.1} parent=1 // pred_check
      _
    $region7: #{tpu_custom_call.1} parent=1 // pred_check_branch
      %23 = sbr.rel (0) target = $region9
    $region8: #{tpu_custom_call.1} parent=1 // pred_region
      %s25 = ssub.s32 64, 64
      %26 = vsyncadd [#allocation6], %s25
      %s28 = sshll.u32 [#allocation5], 4
      %s29 = int_to_ptr.vmem [resolvable:$true] %s28
      %31 = dma.hbm_to_vmem [thread:$0]  %s1, 64, %s29, [#allocation6]
    $region9: #{tpu_custom_call.1} parent=1 // pred_fallthru
      _
    // Predicated region
    $region10: #{tpu_custom_call.1} parent=1 // pred_check
      _
    $region11: #{tpu_custom_call.1} parent=1 // pred_check_branch
      %33 = sbr.rel (0) target = $region13
    $region12: #{tpu_custom_call.1} parent=1 // pred_region
      %34 = dma.done [#allocation3], 1024
    $region13: #{tpu_custom_call.1} parent=1 // pred_fallthru
      _
    // Predicated region
    $region14: #{tpu_custom_call.1} parent=1 // pred_check
      _
    $region15: #{tpu_custom_call.1} parent=1 // pred_check_branch
      %36 = sbr.rel (0) target = $region17
    $region16: #{tpu_custom_call.1} parent=1 // pred_region
      %37 = dma.done [#allocation6], 64
    $region17: #{tpu_custom_call.1} parent=1 // pred_fallthru
      _
    %v38 = vld [vmem:[#allocation2] sm:$0xff]
    %v39 = vld [vmem:[#allocation2 + $0x8] sm:$0xff]
    %v40 = vld [vmem:[#allocation2 + $0x10] sm:$0xff]
    %v41 = vld [vmem:[#allocation2 + $0x18] sm:$0xff]
    %v42 = vld [vmem:[#allocation2 + $0x20] sm:$0xff]
    %v43 = vld [vmem:[#allocation2 + $0x28] sm:$0xff]
    %v44 = vld [vmem:[#allocation2 + $0x30] sm:$0xff]
    %v45 = vld [vmem:[#allocation2 + $0x38] sm:$0xff]
    %v46 = vmul.f32 %v38, %v38
    %v47 = vmul.f32 %v39, %v39
    %v48 = vmul.f32 %v40, %v40
    %v49 = vmul.f32 %v41, %v41
    %v50 = vmul.f32 %v42, %v42
    %v51 = vmul.f32 %v43, %v43
    %v52 = vmul.f32 %v44, %v44
    %v53 = vmul.f32 %v45, %v45
    %v54 = vadd.f32 %v46, %v47
    %v55 = vadd.f32 %v54, %v48
    %v56 = vadd.f32 %v55, %v49
    %57 = vadd.xlane.f32.xlu0 %v56
    %v58 = vpop.xlane.xlu0 %57
    %v59 = vadd.f32 %v50, %v51
    %v60 = vadd.f32 %v59, %v52
    %v61 = vadd.f32 %v60, %v53
    %62 = vadd.xlane.f32.xlu0 %v61
    %v63 = vpop.xlane.xlu0 %62
    %v64 = vrcp.pop 512.0
    %v65 = vmul.f32 %v58, %v64
    %v66 = vmul.f32 %v63, %v64
    %v67 = vadd.f32 %v65, 1e-06
    %v68 = vadd.f32 %v66, 1e-06
    %v69 = vrsqrt.pop %v67
    %v70 = vrsqrt.pop %v68
    %v71 = vmul.f32 %v38, %v69
    %v72 = vmul.f32 %v39, %v69
    %v73 = vmul.f32 %v40, %v69
    %v74 = vmul.f32 %v41, %v69
    %v75 = vmul.f32 %v42, %v70
    %v76 = vmul.f32 %v43, %v70
    %v77 = vmul.f32 %v44, %v70
    %v78 = vmul.f32 %v45, %v70
    %v79 = vld [vmem:[#allocation5] sm:$0xf]
    %v81 = vlaneseq
    %v82 = vshrl.u32 %v81, 7
    %v83 = vsub.s32 0, %v82
    %v84 = vrot.slane %v79, %v83
    %v85 = vlaneseq
    %v86 = vshrl.u32 %v85, 7
    %v87 = vsub.s32 1, %v86
    %v88 = vrot.slane %v79, %v87
    %v89 = vlaneseq
    %v90 = vshrl.u32 %v89, 7
    %v91 = vsub.s32 2, %v90
    %v92 = vrot.slane %v79, %v91
    %v93 = vlaneseq
    %v94 = vshrl.u32 %v93, 7
    %v95 = vsub.s32 3, %v94
    %v96 = vrot.slane %v79, %v95
    %v101 = vmul.f32 %v71, %v84
    %v102 = vmul.f32 %v72, %v88
    %v103 = vmul.f32 %v73, %v92
    %v104 = vmul.f32 %v74, %v96
    %v105 = vmul.f32 %v75, %v84
    %v106 = vmul.f32 %v76, %v88
    %v107 = vmul.f32 %v77, %v92
    %v108 = vmul.f32 %v78, %v96
    %109 = vst [vmem:[#allocation7] sm:$0xff] %v101
    %110 = vst [vmem:[#allocation7 + $0x8] sm:$0xff] %v102
    %111 = vst [vmem:[#allocation7 + $0x10] sm:$0xff] %v103
    %112 = vst [vmem:[#allocation7 + $0x18] sm:$0xff] %v104
    %113 = vst [vmem:[#allocation7 + $0x20] sm:$0xff] %v105
    %114 = vst [vmem:[#allocation7 + $0x28] sm:$0xff] %v106
    %115 = vst [vmem:[#allocation7 + $0x30] sm:$0xff] %v107
    %116 = vst [vmem:[#allocation7 + $0x38] sm:$0xff] %v108
    // Predicated region
    $region18: #{tpu_custom_call.1} parent=1 // pred_check
      _
    $region19: #{tpu_custom_call.1} parent=1 // pred_check_branch
      %118 = sbr.rel (0) target = $region21
    $region20: #{tpu_custom_call.1} parent=1 // pred_region
      %s120 = ssub.s32 1024, 1024
      %121 = vsyncadd [#allocation4], %s120
      %s122 = sshll.u32 [#allocation7], 4
      %s123 = int_to_ptr.vmem [resolvable:$true] %s122
      %128 = dma.vmem_to_hbm [thread:$0]  %s123, 1024, %s2, [#allocation4], 512, 512, 32
    $region21: #{tpu_custom_call.1} parent=1 // pred_fallthru
      _
    // Predicated region
    $region22: #{tpu_custom_call.1} parent=1 // pred_check
      _
    $region23: #{tpu_custom_call.1} parent=1 // pred_check_branch
      %130 = sbr.rel (0) target = $region25
    $region24: #{tpu_custom_call.1} parent=1 // pred_region
      %131 = dma.done [#allocation4], 1024
    $region25: #{tpu_custom_call.1} parent=1 // pred_fallthru
      _
    %132 = vsyncpa [#allocation3], 1
    %133 = vsyncpa [#allocation6], 1
    %134 = vsyncpa [#allocation4], 1

</llo_original>
